<compile_context>
chip_gen: v7x
topology: tpu7x:2x2x1
jax: 0.10.0
libtpu: 0.0.40
codegen_flags: <defaults>
</compile_context>

<pallas_src>
import math

import jax
import jax.numpy as jnp
from jax.experimental import pallas as pl
from jax.experimental.pallas import tpu as pltpu


def _round_up(x, m):
    return ((x + m - 1) // m) * m


def _gelu(x):
    # tanh-approximate GELU, computed in f32 (tanh maps to the EUP).
    # TODO(synk): PyTorch nn.GELU() default is the exact erf form; the tanh
    # approximation (max abs deviation ~1e-3) is used because erf lowering is
    # not guaranteed on every Pallas TPU / interpret backend.
    c = math.sqrt(2.0 / math.pi)
    return 0.5 * x * (1.0 + jnp.tanh(c * (x + 0.044715 * (x * x * x))))


def _mlp_kernel(x_ref, w1_ref, b1_ref, w2_ref, b2_ref, o_ref):
    # (tm, C) @ (C, H) -> +b1 -> GELU -> (tm, H) @ (H, O) -> +b2 -> (tm, O)
    h = jnp.dot(x_ref[...], w1_ref[...], preferred_element_type=jnp.float32)
    h = h + b1_ref[...].astype(jnp.float32)
    h = _gelu(h)
    y = jnp.dot(h.astype(w2_ref.dtype), w2_ref[...],
                preferred_element_type=jnp.float32)
    y = y + b2_ref[...].astype(jnp.float32)
    o_ref[...] = y.astype(o_ref.dtype)


def _pick_row_tile(m, in_features, hidden, out_features, itemsize,
                   vmem_budget=48 * 1024 * 1024, max_tile=512):
    """Largest row tile (multiple of 8, <= max_tile) that fits the budget."""
    # Resident weights + biases (single-buffered: constant index_map).
    w_bytes = (in_features * hidden + hidden * out_features
               + hidden + out_features) * itemsize
    tm = min(max_tile, _round_up(m, 8))
    tm = _round_up(tm, 8)
    while tm > 8:
        # x/out tiles are double-buffered by the pipeline; hidden acts are f32.
        tile_bytes = (2 * tm * (in_features + out_features) * itemsize
                      + tm * hidden * 4 + tm * out_features * 4)
        if w_bytes + tile_bytes <= vmem_budget:
            break
        tm -= 8
    return max(tm, 8)


def mlp_forward(x, w1, b1, w2, b2, *, block_m=None, interpret=False):
    """Fused fc1 -> GELU -> fc2. x: (..., in_features)."""
    in_features, hidden = w1.shape
    hidden2, out_features = w2.shape
    assert hidden2 == hidden and x.shape[-1] == in_features

    lead = x.shape[:-1]
    m = 1
    for d in lead:
        m *= d
    x2 = x.reshape(m, in_features)

    if block_m is None:
        tm = _pick_row_tile(m, in_features, hidden, out_features,
                            jnp.dtype(x.dtype).itemsize)
    else:
        tm = min(block_m, _round_up(m, 8))
    m_pad = _round_up(m, tm)
    if m_pad != m:
        x2 = jnp.pad(x2, ((0, m_pad - m), (0, 0)))

    b1r = b1.reshape(1, hidden)
    b2r = b2.reshape(1, out_features)

    out = pl.pallas_call(
        _mlp_kernel,
        out_shape=jax.ShapeDtypeStruct((m_pad, out_features), x.dtype),
        grid_spec=pltpu.PrefetchScalarGridSpec(
            num_scalar_prefetch=0,
            grid=(m_pad // tm,),
            in_specs=[
                pl.BlockSpec((tm, in_features), lambda i: (i, 0)),
                pl.BlockSpec((in_features, hidden), lambda i: (0, 0)),
                pl.BlockSpec((1, hidden), lambda i: (0, 0)),
                pl.BlockSpec((hidden, out_features), lambda i: (0, 0)),
                pl.BlockSpec((1, out_features), lambda i: (0, 0)),
            ],
            out_specs=pl.BlockSpec((tm, out_features), lambda i: (i, 0)),
        ),
        compiler_params=pltpu.CompilerParams(
            dimension_semantics=("parallel",),
            vmem_limit_bytes=64 * 1024 * 1024,
        ),
        interpret=interpret,
    )(x2, w1, b1r, w2, b2r)

    if m_pad != m:
        out = out[:m]
    return out.reshape(lead + (out_features,))


class Mlp:
    """JAX/Pallas mirror of the PyTorch Mlp module (forward pass)."""

    def __init__(self, in_features, hidden_features=None, out_features=None,
                 drop=0.0, *, key, dtype=jnp.float32):
        out_features = out_features or in_features
        hidden_features = hidden_features or in_features
        k1, k2, k3, k4 = jax.random.split(key, 4)
        lim1 = 1.0 / math.sqrt(in_features)
        lim2 = 1.0 / math.sqrt(hidden_features)
        # Stored as (in, out) so the kernel computes x @ W + b
        # (== x @ W_torch.T + b for a torch Linear whose weight is (out, in)).
        self.w1 = jax.random.uniform(k1, (in_features, hidden_features),
                                     dtype, -lim1, lim1)
        self.b1 = jax.random.uniform(k2, (hidden_features,), dtype, -lim1, lim1)
        self.w2 = jax.random.uniform(k3, (hidden_features, out_features),
                                     dtype, -lim2, lim2)
        self.b2 = jax.random.uniform(k4, (out_features,), dtype, -lim2, lim2)
        self.drop = float(drop)
        self.training = False

    def __call__(self, x, *, rng=None, interpret=False):
        y = mlp_forward(x, self.w1, self.b1, self.w2, self.b2,
                        interpret=interpret)
        if self.training and self.drop > 0.0:
            # Dropout mask hoisted to plain JAX: no per-grid-step PRNG inside
            # the kernel (identity in eval / p=0, matching nn.Dropout).
            assert rng is not None, "training-mode dropout requires an rng key"
            keep = 1.0 - self.drop
            mask = jax.random.bernoulli(rng, keep, y.shape)
            y = jnp.where(mask, y / keep, 0.0).astype(y.dtype)
        return y


def _mlp_reference(x, w1, b1, w2, b2):
    hp = jax.lax.Precision.HIGHEST
    h = jnp.dot(x, w1, precision=hp) + b1
    h = _gelu(h.astype(jnp.float32))
    y = jnp.dot(h.astype(w2.dtype), w2, precision=hp) + b2
    return y.astype(x.dtype)


if __name__ == "__main__":
    key = jax.random.PRNGKey(0)
    kx, kp = jax.random.split(key)

    # Small shapes consistent with the module: batch=2, seq=8, in_features=32,
    # hidden_features=64, out_features defaults to in_features (=32).
    B, S, C, H = 2, 8, 32, 64
    x = jax.random.normal(kx, (B, S, C), dtype=jnp.float32)

    module = Mlp(in_features=C, hidden_features=H, drop=0.0, key=kp)
    module.training = False  # eval: Dropout is identity (drop=0.0 anyway)

    y = jax.block_until_ready(module(x))
    y_ref = jax.block_until_ready(
        _mlp_reference(x, module.w1, module.b1, module.w2, module.b2))

    assert y.shape == (B, S, C), y.shape
    # Loose-ish tolerance: MXU f32 matmuls may use multi-pass bf16 depending
    # on TPU generation / default matmul precision.
    if bool(jnp.allclose(y, y_ref, rtol=1e-2, atol=1e-2)):
        print("KERNEL_OK")
    else:
        print("KERNEL_MISMATCH", float(jnp.max(jnp.abs(y - y_ref))))
</pallas_src>

<mosaic_0001>
module attributes {stable_mosaic.version = 11 : i64} {
  func.func @_mlp_kernel(%arg0: i32, %arg1: memref<16x32xf32, #tpu.memory_space<vmem>>, %arg2: memref<32x64xf32, #tpu.memory_space<vmem>>, %arg3: memref<1x64xf32, #tpu.memory_space<vmem>>, %arg4: memref<64x32xf32, #tpu.memory_space<vmem>>, %arg5: memref<1x32xf32, #tpu.memory_space<vmem>>, %arg6: memref<16x32xf32, #tpu.memory_space<vmem>>) attributes {dimension_semantics = [#tpu.dimension_semantics<parallel>], iteration_bounds = array<i64: 1>, scalar_prefetch = 0 : i64, scratch_operands = 0 : i64, tpu.core_type = #tpu.core_type<tc>, window_params = [{transform_indices = @transform_0, window_bounds = array<i64: 16, 32>}, {pipeline_mode = #tpu.pipeline_mode<synchronous>, transform_indices = @transform_1, window_bounds = array<i64: 32, 64>}, {pipeline_mode = #tpu.pipeline_mode<synchronous>, transform_indices = @transform_2, window_bounds = array<i64: 1, 64>}, {pipeline_mode = #tpu.pipeline_mode<synchronous>, transform_indices = @transform_3, window_bounds = array<i64: 64, 32>}, {pipeline_mode = #tpu.pipeline_mode<synchronous>, transform_indices = @transform_4, window_bounds = array<i64: 1, 32>}, {transform_indices = @transform_5, window_bounds = array<i64: 16, 32>}]} {
    %c0 = arith.constant 0 : index
    %c0_0 = arith.constant 0 : index
    %0 = vector.load %arg1[%c0, %c0_0] : memref<16x32xf32, #tpu.memory_space<vmem>>, vector<16x32xf32>
    %c0_1 = arith.constant 0 : index
    %c0_2 = arith.constant 0 : index
    %1 = vector.load %arg2[%c0_1, %c0_2] : memref<32x64xf32, #tpu.memory_space<vmem>>, vector<32x64xf32>
    %cst = arith.constant dense<0.000000e+00> : vector<16x64xf32>
    %2 = tpu.matmul %0, %1, %cst {dimension_numbers = #tpu.dot_dimension_numbers<[1], [0], [0], [1], [0, 0, 1, 1], [], []>} : vector<16x32xf32>, vector<32x64xf32>, vector<16x64xf32> -> vector<16x64xf32>
    %c0_3 = arith.constant 0 : index
    %c0_4 = arith.constant 0 : index
    %3 = vector.load %arg3[%c0_3, %c0_4] : memref<1x64xf32, #tpu.memory_space<vmem>>, vector<1x64xf32>
    %4 = vector.broadcast %3 : vector<1x64xf32> to vector<16x64xf32>
    %5 = arith.addf %2, %4 : vector<16x64xf32>
    %cst_5 = arith.constant 5.000000e-01 : f32
    %6 = vector.broadcast %cst_5 : f32 to vector<16x64xf32>
    %7 = arith.mulf %6, %5 : vector<16x64xf32>
    %8 = arith.mulf %5, %5 : vector<16x64xf32>
    %9 = arith.mulf %8, %5 : vector<16x64xf32>
    %cst_6 = arith.constant 4.471500e-02 : f32
    %10 = vector.broadcast %cst_6 : f32 to vector<16x64xf32>
    %11 = arith.mulf %10, %9 : vector<16x64xf32>
    %12 = arith.addf %5, %11 : vector<16x64xf32>
    %cst_7 = arith.constant 0.797884583 : f32
    %13 = vector.broadcast %cst_7 : f32 to vector<16x64xf32>
    %14 = arith.mulf %13, %12 : vector<16x64xf32>
    %15 = math.tanh %14 : vector<16x64xf32>
    %cst_8 = arith.constant 1.000000e+00 : f32
    %16 = vector.broadcast %cst_8 : f32 to vector<16x64xf32>
    %17 = arith.addf %16, %15 : vector<16x64xf32>
    %18 = arith.mulf %7, %17 : vector<16x64xf32>
    %c0_9 = arith.constant 0 : index
    %c0_10 = arith.constant 0 : index
    %19 = vector.load %arg4[%c0_9, %c0_10] : memref<64x32xf32, #tpu.memory_space<vmem>>, vector<64x32xf32>
    %cst_11 = arith.constant dense<0.000000e+00> : vector<16x32xf32>
    %20 = tpu.matmul %18, %19, %cst_11 {dimension_numbers = #tpu.dot_dimension_numbers<[1], [0], [0], [1], [0, 0, 1, 1], [], []>} : vector<16x64xf32>, vector<64x32xf32>, vector<16x32xf32> -> vector<16x32xf32>
    %c0_12 = arith.constant 0 : index
    %c0_13 = arith.constant 0 : index
    %21 = vector.load %arg5[%c0_12, %c0_13] : memref<1x32xf32, #tpu.memory_space<vmem>>, vector<1x32xf32>
    %22 = vector.broadcast %21 : vector<1x32xf32> to vector<16x32xf32>
    %23 = arith.addf %20, %22 : vector<16x32xf32>
    %c0_14 = arith.constant 0 : index
    %c0_15 = arith.constant 0 : index
    %24 = vector.load %arg6[%c0_14, %c0_15] : memref<16x32xf32, #tpu.memory_space<vmem>>, vector<16x32xf32>
    tpu.vector_store %arg6[%c0_14, %c0_15], %23 {strides = array<i32>} : memref<16x32xf32, #tpu.memory_space<vmem>>, vector<16x32xf32>,
    return
  }
  func.func @transform_0(%arg0: i32) -> (i32, i32) {
    %c0_i32 = arith.constant 0 : i32
    %c0_i32_0 = arith.constant 0 : i32
    return %arg0, %c0_i32 : i32, i32
  }
  func.func @transform_1(%arg0: i32) -> (i32, i32) {
    %c0_i32 = arith.constant 0 : i32
    %c0_i32_0 = arith.constant 0 : i32
    %c0_i32_1 = arith.constant 0 : i32
    return %c0_i32, %c0_i32_0 : i32, i32
  }
  func.func @transform_2(%arg0: i32) -> (i32, i32) {
    %c0_i32 = arith.constant 0 : i32
    %c0_i32_0 = arith.constant 0 : i32
    %c0_i32_1 = arith.constant 0 : i32
    return %c0_i32, %c0_i32_0 : i32, i32
  }
  func.func @transform_3(%arg0: i32) -> (i32, i32) {
    %c0_i32 = arith.constant 0 : i32
    %c0_i32_0 = arith.constant 0 : i32
    %c0_i32_1 = arith.constant 0 : i32
    return %c0_i32, %c0_i32_0 : i32, i32
  }
  func.func @transform_4(%arg0: i32) -> (i32, i32) {
    %c0_i32 = arith.constant 0 : i32
    %c0_i32_0 = arith.constant 0 : i32
    %c0_i32_1 = arith.constant 0 : i32
    return %c0_i32, %c0_i32_0 : i32, i32
  }
  func.func @transform_5(%arg0: i32) -> (i32, i32) {
    %c0_i32 = arith.constant 0 : i32
    %c0_i32_0 = arith.constant 0 : i32
    return %arg0, %c0_i32 : i32, i32
  }
}

</mosaic_0001>

<llo_original>
// kernel: tpu_custom_call.1
$region0: #{tpu_custom_call.1}
  #allocation0 [shape = 'u32[]', space=smem, size = 0x4, offset = 0x4, fixed_abs, tag = 'smem constant byte address 0x4 - core index']
  #allocation1 [shape = 'u32[144,128]{1,0:T(1,128)}', space=vmem, size = 0x12000, scoped, tag = 'internal scratch']
  %s0 = inlined_call_operand.hbm [shape: f32[16,32], index: 0, kind: input, shape index: {}]
  %s1 = inlined_call_operand.hbm [shape: f32[32,64], index: 1, kind: input, shape index: {}]
  %s2 = inlined_call_operand.hbm [shape: f32[1,64], index: 2, kind: input, shape index: {}]
  %s3 = inlined_call_operand.hbm [shape: f32[64,32], index: 3, kind: input, shape index: {}]
  %s4 = inlined_call_operand.hbm [shape: f32[1,32], index: 4, kind: input, shape index: {}]
  %s5 = inlined_call_operand.hbm [shape: f32[16,32], index: 5, kind: output, shape index: {}]
  %s6 = sld [smem:[#allocation0]]
  $region50: #{tpu_custom_call.1} parent=0
    _
  %s8 = ssub.s32 1, %s6
  %s9 = scalar_select 0, %s8, %s6
  $region1: #{tpu_custom_call.1} parent=0
    #allocation2 [shape = 'u8[8192]{0}', space=vmem, size = 0x2000, scoped, tag = 'input window, operand 0, single buffered']
    #allocation3 [shape = 's32[1]{0}', space=sflag, size = 0x4, scoped, tag = 'scoped memory for tpu_custom_call.1']
    #allocation4 [shape = 's32[1]{0}', space=sflag, size = 0x4, scoped, tag = 'scoped memory for tpu_custom_call.1']
    #allocation5 [shape = 'u8[16384]{0}', space=vmem, size = 0x4000, scoped, tag = 'input window, operand 1, single buffered']
    #allocation6 [shape = 's32[1]{0}', space=sflag, size = 0x4, scoped, tag = 'scoped memory for tpu_custom_call.1']
    #allocation7 [shape = 'u8[512]{0}', space=vmem, size = 0x400, scoped, tag = 'input window, operand 2, single buffered']
    #allocation8 [shape = 'u8[32768]{0}', space=vmem, size = 0x8000, scoped, tag = 'input window, operand 3, single buffered']
    #allocation9 [shape = 's32[1]{0}', space=sflag, size = 0x4, scoped, tag = 'scoped memory for tpu_custom_call.1']
    #allocation10 [shape = 'u8[512]{0}', space=vmem, size = 0x400, scoped, tag = 'input window, operand 4, single buffered']
    #allocation11 [shape = 'u8[8192]{0}', space=vmem, size = 0x2000, scoped, tag = 'output window, operand 0, single buffered']
    %10 = vsyncpa [#allocation3], 0
    %11 = vsyncpa [#allocation6], 0
    %12 = vsyncpa [#allocation9], 0
    %13 = vsyncpa [#allocation4], 0
    // Predicated region
    $region2: #{tpu_custom_call.1} parent=1 // pred_check
      _
    $region3: #{tpu_custom_call.1} parent=1 // pred_check_branch
      %15 = sbr.rel (0) target = $region5
    $region4: #{tpu_custom_call.1} parent=1 // pred_region
      %s17 = ssub.s32 256, 256
      %18 = vsyncadd [#allocation3], %s17
      %s19 = sshll.u32 [#allocation2], 4
      %s20 = int_to_ptr.vmem [resolvable:$true] %s19
      %25 = dma.hbm_to_vmem [thread:$0]  %s0, 256, %s20, [#allocation3], 128, 128, 8
    $region5: #{tpu_custom_call.1} parent=1 // pred_fallthru
      _
    // Predicated region
    $region6: #{tpu_custom_call.1} parent=1 // pred_check
      _
    $region7: #{tpu_custom_call.1} parent=1 // pred_check_branch
      %27 = sbr.rel (0) target = $region9
    $region8: #{tpu_custom_call.1} parent=1 // pred_region
      %s29 = ssub.s32 512, 512
      %30 = vsyncadd [#allocation6], %s29
      %s31 = sshll.u32 [#allocation5], 4
      %s32 = int_to_ptr.vmem [resolvable:$true] %s31
      %37 = dma.hbm_to_vmem [thread:$0]  %s1, 512, %s32, [#allocation6], 128, 128, 8
    $region9: #{tpu_custom_call.1} parent=1 // pred_fallthru
      _
    // Predicated region
    $region10: #{tpu_custom_call.1} parent=1 // pred_check
      _
    $region11: #{tpu_custom_call.1} parent=1 // pred_check_branch
      %39 = sbr.rel (0) target = $region13
    $region12: #{tpu_custom_call.1} parent=1 // pred_region
      %s41 = ssub.s32 16, 16
      %42 = vsyncadd [#allocation6], %s41
      %s44 = sshll.u32 [#allocation7], 4
      %s45 = int_to_ptr.vmem [resolvable:$true] %s44
      %47 = dma.hbm_to_vmem [thread:$0]  %s2, 16, %s45, [#allocation6]
    $region13: #{tpu_custom_call.1} parent=1 // pred_fallthru
      _
    // Predicated region
    $region14: #{tpu_custom_call.1} parent=1 // pred_check
      _
    $region15: #{tpu_custom_call.1} parent=1 // pred_check_branch
      %49 = sbr.rel (0) target = $region17
    $region16: #{tpu_custom_call.1} parent=1 // pred_region
      %s51 = ssub.s32 1024, 1024
      %52 = vsyncadd [#allocation9], %s51
      %s53 = sshll.u32 [#allocation8], 4
      %s54 = int_to_ptr.vmem [resolvable:$true] %s53
      %59 = dma.hbm_to_vmem [thread:$0]  %s3, 1024, %s54, [#allocation9], 128, 128, 8
    $region17: #{tpu_custom_call.1} parent=1 // pred_fallthru
      _
    // Predicated region
    $region18: #{tpu_custom_call.1} parent=1 // pred_check
      _
    $region19: #{tpu_custom_call.1} parent=1 // pred_check_branch
      %61 = sbr.rel (0) target = $region21
    $region20: #{tpu_custom_call.1} parent=1 // pred_region
      %s63 = ssub.s32 16, 16
      %64 = vsyncadd [#allocation9], %s63
      %s66 = sshll.u32 [#allocation10], 4
      %s67 = int_to_ptr.vmem [resolvable:$true] %s66
      %69 = dma.hbm_to_vmem [thread:$0]  %s4, 16, %s67, [#allocation9]
    $region21: #{tpu_custom_call.1} parent=1 // pred_fallthru
      _
    // Predicated region
    $region22: #{tpu_custom_call.1} parent=1 // pred_check
      _
    $region23: #{tpu_custom_call.1} parent=1 // pred_check_branch
      %71 = sbr.rel (0) target = $region25
    $region24: #{tpu_custom_call.1} parent=1 // pred_region
      %72 = dma.done [#allocation3], 256
    $region25: #{tpu_custom_call.1} parent=1 // pred_fallthru
      _
    // Predicated region
    $region26: #{tpu_custom_call.1} parent=1 // pred_check
      _
    $region27: #{tpu_custom_call.1} parent=1 // pred_check_branch
      %74 = sbr.rel (0) target = $region29
    $region28: #{tpu_custom_call.1} parent=1 // pred_region
      %75 = dma.done [#allocation6], 512
    $region29: #{tpu_custom_call.1} parent=1 // pred_fallthru
      _
    // Predicated region
    $region30: #{tpu_custom_call.1} parent=1 // pred_check
      _
    $region31: #{tpu_custom_call.1} parent=1 // pred_check_branch
      %77 = sbr.rel (0) target = $region33
    $region32: #{tpu_custom_call.1} parent=1 // pred_region
      %78 = dma.done [#allocation6], 16
    $region33: #{tpu_custom_call.1} parent=1 // pred_fallthru
      _
    // Predicated region
    $region34: #{tpu_custom_call.1} parent=1 // pred_check
      _
    $region35: #{tpu_custom_call.1} parent=1 // pred_check_branch
      %80 = sbr.rel (0) target = $region37
    $region36: #{tpu_custom_call.1} parent=1 // pred_region
      %81 = dma.done [#allocation9], 1024
    $region37: #{tpu_custom_call.1} parent=1 // pred_fallthru
      _
    // Predicated region
    $region38: #{tpu_custom_call.1} parent=1 // pred_check
      _
    $region39: #{tpu_custom_call.1} parent=1 // pred_check_branch
      %83 = sbr.rel (0) target = $region41
    $region40: #{tpu_custom_call.1} parent=1 // pred_region
      %84 = dma.done [#allocation9], 16
    $region41: #{tpu_custom_call.1} parent=1 // pred_fallthru
      _
    %v85 = vld [vmem:[#allocation2] sm:$0xff]
    %v86 = vld [vmem:[#allocation2 + $0x8] sm:$0xff]
    %v87 = vld [vmem:[#allocation5] sm:$0xff]
    %v88 = vld [vmem:[#allocation5 + $0x8] sm:$0xff]
    %v89 = vld [vmem:[#allocation5 + $0x10] sm:$0xff]
    %v90 = vld [vmem:[#allocation5 + $0x18] sm:$0xff]
    %v91 = vld [vmem:[#allocation7] sm:$0x1]
    %v93 = vlaneseq
    %v94 = vshrl.u32 %v93, 7
    %v95 = vsub.s32 0, %v94
    %v96 = vrot.slane %v91, %v95
    %vm98 = vcmask 261120
    %v100 = vsel %vm98, %v85, 0
    %v103 = vsel %vm98, %v86, 0
    %105 = vmatprep.subr.mxu0 0.0
    %106 = vmatpush1.msra.mxu0 %v87
    %107 = vmatprep.subr.mxu0 0.0
    %108 = vmatpush1.msra.mxu0 %v88
    %109 = vmatprep.subr.mxu0 0.0
    %110 = vmatpush1.msra.mxu0 %v89
    %111 = vmatprep.subr.mxu0 0.0
    %112 = vmatpush1.msra.mxu0 %v90
    %113 = vmatprep.subr.mxu0 0.0
    %114 = vmatpush1.msra.mxu0 0.0
    %115 = vmatprep.subr.mxu0 0.0
    %116 = vmatpush1.msra.mxu0 0.0
    %117 = vmatprep.subr.mxu0 0.0
    %118 = vmatpush1.msra.mxu0 0.0
    %119 = vmatprep.subr.mxu0 0.0
    %120 = vmatpush1.msra.mxu0 0.0
    %121 = vmatprep.subr.mxu0 0.0
    %122 = vmatpush1.msra.mxu0 0.0
    %123 = vmatprep.subr.mxu0 0.0
    %124 = vmatpush1.msra.mxu0 0.0
    %125 = vmatprep.subr.mxu0 0.0
    %126 = vmatpush1.msra.mxu0 0.0
    %127 = vmatprep.subr.mxu0 0.0
    %128 = vmatpush1.msra.mxu0 0.0
    %129 = vmatprep.subr.mxu0 0.0
    %130 = vmatpush1.msra.mxu0 0.0
    %131 = vmatprep.subr.mxu0 0.0
    %132 = vmatpush1.msra.mxu0 0.0
    %133 = vmatprep.subr.mxu0 0.0
    %134 = vmatpush1.msra.mxu0 0.0
    %135 = vmatprep.subr.mxu0 0.0
    %136 = vmatpush1.msra.mxu0 0.0
    %137 = vmatprep.subr.mxu0 0.0
    %138 = vmatpush1.msra.mxu0 0.0
    %139 = vmatprep.subr.mxu0 0.0
    %140 = vmatpush1.msra.mxu0 0.0
    %141 = vmatprep.subr.mxu0 0.0
    %142 = vmatpush1.msra.mxu0 0.0
    %143 = vmatprep.subr.mxu0 0.0
    %144 = vmatpush1.msra.mxu0 0.0
    %145 = vmatprep.subr.mxu0 0.0
    %146 = vmatpush1.msra.mxu0 0.0
    %147 = vmatprep.subr.mxu0 0.0
    %148 = vmatpush1.msra.mxu0 0.0
    %149 = vmatprep.subr.mxu0 0.0
    %150 = vmatpush1.msra.mxu0 0.0
    %151 = vmatprep.subr.mxu0 0.0
    %152 = vmatpush1.msra.mxu0 0.0
    %153 = vmatprep.subr.mxu0 0.0
    %154 = vmatpush1.msra.mxu0 0.0
    %155 = vmatprep.subr.mxu0 0.0
    %156 = vmatpush1.msra.mxu0 0.0
    %157 = vmatprep.subr.mxu0 0.0
    %158 = vmatpush1.msra.mxu0 0.0
    %159 = vmatprep.subr.mxu0 0.0
    %160 = vmatpush1.msra.mxu0 0.0
    %161 = vmatprep.subr.mxu0 0.0
    %162 = vmatpush1.msra.mxu0 0.0
    %163 = vmatprep.subr.mxu0 0.0
    %164 = vmatpush1.msra.mxu0 0.0
    %165 = vmatprep.subr.mxu0 0.0
    %166 = vmatpush1.msra.mxu0 0.0
    %167 = vmatprep.subr.mxu0 0.0
    %168 = vmatpush1.msra.mxu0 0.0
    %169 = vmatprep.mubr.f32.mxu0 0.0
    %170 = vmatmul.mubr.f32.gmra.mrb[0].mxu0 %v100
    %v171 = vpop.f32.mrb[0].mxu0
    %v172 = vadd.f32 %v96, %v171
    %v173 = vpop.f32.mrb[0].mxu0
    %174 = vmatprep.mubr.f32.mxu0 0.0
    %175 = vmatmul.mubr.f32.gmra.mrb[0].mxu0 %v103
    %v176 = vpop.f32.mrb[0].mxu0
    %v177 = vadd.f32 %v96, %v176
    %v178 = vpop.f32.mrb[0].mxu0
    %179 = vdwg.mxu0
    %v180 = vmul.f32 %v172, 0.5
    %v181 = vmul.f32 %v177, 0.5
    %v182 = vmul.f32 %v172, %v172
    %v183 = vmul.f32 %v177, %v177
    %v184 = vmul.f32 %v182, %v172
    %v185 = vmul.f32 %v183, %v177
    %v186 = vmul.f32 %v184, 0.044715
    %v187 = vmul.f32 %v185, 0.044715
    %v188 = vadd.f32 %v172, %v186
    %v189 = vadd.f32 %v177, %v187
    %v190 = vmul.f32 %v188, 0.7978846
    %v191 = vmul.f32 %v189, 0.7978846
    %v192 = vtanh.pop %v190
    %v193 = vtanh.pop %v191
    %v194 = vadd.f32 %v192, 1.0
    %v195 = vadd.f32 %v193, 1.0
    %v196 = vmul.f32 %v180, %v194
    %v197 = vmul.f32 %v181, %v195
    %v198 = vld [vmem:[#allocation8] sm:$0xff]
    %v199 = vld [vmem:[#allocation8 + $0x8] sm:$0xff]
    %v200 = vld [vmem:[#allocation8 + $0x10] sm:$0xff]
    %v201 = vld [vmem:[#allocation8 + $0x18] sm:$0xff]
    %v202 = vld [vmem:[#allocation8 + $0x20] sm:$0xff]
    %v203 = vld [vmem:[#allocation8 + $0x28] sm:$0xff]
    %v204 = vld [vmem:[#allocation8 + $0x30] sm:$0xff]
    %v205 = vld [vmem:[#allocation8 + $0x38] sm:$0xff]
    %v206 = vld [vmem:[#allocation10] sm:$0x1]
    %v208 = vlaneseq
    %v209 = vshrl.u32 %v208, 7
    %v210 = vsub.s32 0, %v209
    %v211 = vrot.slane %v206, %v210
    %vm213 = vcmask 523264
    %v215 = vsel %vm213, %v196, 0
    %v218 = vsel %vm213, %v197, 0
    %220 = vmatprep.subr.mxu0 0.0
    %221 = vmatpush1.msra.mxu0 %v198
    %222 = vmatprep.subr.mxu0 0.0
    %223 = vmatpush1.msra.mxu0 %v199
    %224 = vmatprep.subr.mxu0 0.0
    %225 = vmatpush1.msra.mxu0 %v200
    %226 = vmatprep.subr.mxu0 0.0
    %227 = vmatpush1.msra.mxu0 %v201
    %228 = vmatprep.subr.mxu0 0.0
    %229 = vmatpush1.msra.mxu0 %v202
    %230 = vmatprep.subr.mxu0 0.0
    %231 = vmatpush1.msra.mxu0 %v203
    %232 = vmatprep.subr.mxu0 0.0
    %233 = vmatpush1.msra.mxu0 %v204
    %234 = vmatprep.subr.mxu0 0.0
    %235 = vmatpush1.msra.mxu0 %v205
    %236 = vmatprep.subr.mxu0 0.0
    %237 = vmatpush1.msra.mxu0 0.0
    %238 = vmatprep.subr.mxu0 0.0
    %239 = vmatpush1.msra.mxu0 0.0
    %240 = vmatprep.subr.mxu0 0.0
    %241 = vmatpush1.msra.mxu0 0.0
    %242 = vmatprep.subr.mxu0 0.0
    %243 = vmatpush1.msra.mxu0 0.0
    %244 = vmatprep.subr.mxu0 0.0
    %245 = vmatpush1.msra.mxu0 0.0
    %246 = vmatprep.subr.mxu0 0.0
    %247 = vmatpush1.msra.mxu0 0.0
    %248 = vmatprep.subr.mxu0 0.0
    %249 = vmatpush1.msra.mxu0 0.0
    %250 = vmatprep.subr.mxu0 0.0
    %251 = vmatpush1.msra.mxu0 0.0
    %252 = vmatprep.subr.mxu0 0.0
    %253 = vmatpush1.msra.mxu0 0.0
    %254 = vmatprep.subr.mxu0 0.0
    %255 = vmatpush1.msra.mxu0 0.0
    %256 = vmatprep.subr.mxu0 0.0
    %257 = vmatpush1.msra.mxu0 0.0
    %258 = vmatprep.subr.mxu0 0.0
    %259 = vmatpush1.msra.mxu0 0.0
    %260 = vmatprep.subr.mxu0 0.0
    %261 = vmatpush1.msra.mxu0 0.0
    %262 = vmatprep.subr.mxu0 0.0
    %263 = vmatpush1.msra.mxu0 0.0
    %264 = vmatprep.subr.mxu0 0.0
    %265 = vmatpush1.msra.mxu0 0.0
    %266 = vmatprep.subr.mxu0 0.0
    %267 = vmatpush1.msra.mxu0 0.0
    %268 = vmatprep.subr.mxu0 0.0
    %269 = vmatpush1.msra.mxu0 0.0
    %270 = vmatprep.subr.mxu0 0.0
    %271 = vmatpush1.msra.mxu0 0.0
    %272 = vmatprep.subr.mxu0 0.0
    %273 = vmatpush1.msra.mxu0 0.0
    %274 = vmatprep.subr.mxu0 0.0
    %275 = vmatpush1.msra.mxu0 0.0
    %276 = vmatprep.subr.mxu0 0.0
    %277 = vmatpush1.msra.mxu0 0.0
    %278 = vmatprep.subr.mxu0 0.0
    %279 = vmatpush1.msra.mxu0 0.0
    %280 = vmatprep.subr.mxu0 0.0
    %281 = vmatpush1.msra.mxu0 0.0
    %282 = vmatprep.subr.mxu0 0.0
    %283 = vmatpush1.msra.mxu0 0.0
    %284 = vmatprep.mubr.f32.mxu0 0.0
    %285 = vmatmul.mubr.f32.gmra.mrb[0].mxu0 %v215
    %v286 = vpop.f32.mrb[0].mxu0
    %v287 = vadd.f32 %v211, %v286
    %v288 = vpop.f32.mrb[0].mxu0
    %289 = vmatprep.mubr.f32.mxu0 0.0
    %290 = vmatmul.mubr.f32.gmra.mrb[0].mxu0 %v218
    %v291 = vpop.f32.mrb[0].mxu0
    %v292 = vadd.f32 %v211, %v291
    %v293 = vpop.f32.mrb[0].mxu0
    %294 = vdwg.mxu0
    %295 = vst.msk [vmem:[#allocation11] sm:$0xff] %vm98, %v287
    %296 = vst.msk [vmem:[#allocation11 + $0x8] sm:$0xff] %vm98, %v292
    // Predicated region
    $region42: #{tpu_custom_call.1} parent=1 // pred_check
      _
    $region43: #{tpu_custom_call.1} parent=1 // pred_check_branch
      %298 = sbr.rel (0) target = $region45
    $region44: #{tpu_custom_call.1} parent=1 // pred_region
      %s300 = ssub.s32 256, 256
      %301 = vsyncadd [#allocation4], %s300
      %s302 = sshll.u32 [#allocation11], 4
      %s303 = int_to_ptr.vmem [resolvable:$true] %s302
      %308 = dma.vmem_to_hbm [thread:$0]  %s303, 256, %s5, [#allocation4], 128, 128, 8
    $region45: #{tpu_custom_call.1} parent=1 // pred_fallthru
      _
    // Predicated region
    $region46: #{tpu_custom_call.1} parent=1 // pred_check
      _
    $region47: #{tpu_custom_call.1} parent=1 // pred_check_branch
      %310 = sbr.rel (0) target = $region49
    $region48: #{tpu_custom_call.1} parent=1 // pred_region
      %311 = dma.done [#allocation4], 256
    $region49: #{tpu_custom_call.1} parent=1 // pred_fallthru
      _
    %312 = vsyncpa [#allocation3], 1
    %313 = vsyncpa [#allocation6], 1
    %314 = vsyncpa [#allocation9], 1
    %315 = vsyncpa [#allocation4], 1

</llo_original>
